<compile_context>
chip_gen: v7x
topology: tpu7x:2x2x1
jax: 0.10.0
libtpu: 0.0.40
codegen_flags: <defaults>
</compile_context>

<pallas_src>
import functools

import jax
import jax.numpy as jnp
from jax.experimental import pallas as pl
from jax.experimental.pallas import tpu as pltpu


def _round_up(x, m):
    return ((x + m - 1) // m) * m


def _sublane_multiple(dtype):
    # f32 -> 8, bf16 -> 16, int8/fp8 -> 32 (sub-32-bit dtypes pack along sublanes)
    itemsize = jnp.dtype(dtype).itemsize
    return max(8, 32 // max(itemsize, 1))


def mlp_kernel(x_ref, w1_ref, w3_ref, w2_ref, o_ref, acc_ref):
    # x_ref : (tm, H)    row tile (resident across the F axis)
    # w1_ref: (H, tf)    slice of W1 along the intermediate dim
    # w3_ref: (H, tf)    slice of W3 along the intermediate dim
    # w2_ref: (tf, H)    slice of W2 along the intermediate dim
    # o_ref : (tm, H)    output tile (resident across the F axis)
    # acc_ref: (tm, H)   f32 accumulator scratch
    f = pl.program_id(1)

    @pl.when(f == 0)
    def _():
        acc_ref[...] = jnp.zeros_like(acc_ref)

    x = x_ref[...]
    h1 = jnp.dot(x, w1_ref[...], preferred_element_type=jnp.float32)
    h3 = jnp.dot(x, w3_ref[...], preferred_element_type=jnp.float32)
    g = (h1 * jax.lax.logistic(h1)) * h3          # silu(h1) * h3, in f32
    acc_ref[...] += jnp.dot(
        g.astype(x_ref.dtype), w2_ref[...], preferred_element_type=jnp.float32
    )

    @pl.when(f == pl.num_programs(1) - 1)
    def _():
        o_ref[...] = acc_ref[...].astype(o_ref.dtype)


def mlp(x, w1, w2, w3, *, block_rows=256, block_f=512):
    """SwiGLU MLP forward: (silu(x @ w1) * (x @ w3)) @ w2.

    x : (..., H)
    w1: (H, F), w3: (H, F), w2: (F, H)   -- (in, out) layout
        (== transpose of PyTorch nn.Linear.weight)
    """
    orig_shape = x.shape
    H = orig_shape[-1]
    F = w1.shape[1]
    assert w1.shape == (H, F) and w3.shape == (H, F) and w2.shape == (F, H)

    x2d = x.reshape(-1, H)
    R = x2d.shape[0]

    # Row tile: large (per-grid-step overhead dominates tiny tiles), aligned to
    # the sublane packing of the input dtype. Pad rows instead of asserting
    # divisibility; padded rows are zeros and are sliced off at the end.
    sub = _sublane_multiple(x.dtype)
    tm = min(_round_up(block_rows, sub), _round_up(R, sub))
    R_pad = _round_up(R, tm)
    if R_pad != R:
        x2d = jnp.pad(x2d, ((0, R_pad - R), (0, 0)))

    # Intermediate-dim tile: multiple of 128 lanes, or the full dim if small.
    tf = min(block_f, F)
    if F % tf != 0 or (tf % 128 != 0 and tf != F):
        tf = F

    grid = (R_pad // tm, F // tf)

    # Per-step VMEM footprint estimate (double-buffered inputs/outputs + acc),
    # with headroom; capped so it stays within v7x's 64 MiB physical VMEM.
    itemsize = jnp.dtype(x.dtype).itemsize
    step_bytes = 2 * (
        tm * H * itemsize          # x tile
        + 2 * H * tf * itemsize    # w1 + w3 tiles
        + tf * H * itemsize        # w2 tile
        + tm * H * itemsize        # out tile
    ) + tm * H * 4                 # f32 accumulator scratch
    vmem_limit = min(max(2 * step_bytes, 32 * 1024 * 1024), 64 * 1024 * 1024)

    out = pl.pallas_call(
        mlp_kernel,
        out_shape=jax.ShapeDtypeStruct((R_pad, H), x.dtype),
        grid_spec=pltpu.PrefetchScalarGridSpec(
            num_scalar_prefetch=0,
            grid=grid,
            in_specs=[
                pl.BlockSpec((tm, H), lambda i, f: (i, 0)),   # x rows (resident over f)
                pl.BlockSpec((H, tf), lambda i, f: (0, f)),   # w1 slice
                pl.BlockSpec((H, tf), lambda i, f: (0, f)),   # w3 slice
                pl.BlockSpec((tf, H), lambda i, f: (f, 0)),   # w2 slice
            ],
            out_specs=pl.BlockSpec((tm, H), lambda i, f: (i, 0)),
            scratch_shapes=[pltpu.VMEM((tm, H), jnp.float32)],
        ),
        compiler_params=pltpu.CompilerParams(
            dimension_semantics=("parallel", "arbitrary"),
            vmem_limit_bytes=vmem_limit,
        ),
    )(x2d, w1, w3, w2)

    return out[:R].reshape(orig_shape)


if __name__ == "__main__":
    # config: hidden_size = 32, k_hidden = 4  -> intermediate F = 128
    hidden_size = 32
    k_hidden = 4
    F = k_hidden * hidden_size
    batch, seq = 2, 8

    key = jax.random.PRNGKey(0)
    kx, k1, k2, k3 = jax.random.split(key, 4)
    x = jax.random.normal(kx, (batch, seq, hidden_size), dtype=jnp.float32)
    # weights in (in, out) layout (transpose of PyTorch nn.Linear.weight)
    scale1 = 1.0 / (hidden_size ** 0.5)
    scale2 = 1.0 / (F ** 0.5)
    w1 = jax.random.normal(k1, (hidden_size, F), dtype=jnp.float32) * scale1
    w3 = jax.random.normal(k3, (hidden_size, F), dtype=jnp.float32) * scale1
    w2 = jax.random.normal(k2, (F, hidden_size), dtype=jnp.float32) * scale2

    out = mlp(x, w1, w2, w3)
    out = jax.block_until_ready(out)

    # reference check in plain JAX
    x2d = x.reshape(-1, hidden_size)
    h1 = x2d @ w1
    h3 = x2d @ w3
    ref = ((h1 * jax.nn.sigmoid(h1)) * h3) @ w2
    ref = ref.reshape(x.shape).astype(x.dtype)
    assert jnp.allclose(out, ref, atol=1e-4, rtol=1e-4), "mismatch vs reference"

    print("KERNEL_OK")
</pallas_src>

<mosaic_0001>
module attributes {stable_mosaic.version = 11 : i64} {
  func.func @mlp_kernel(%arg0: i32, %arg1: i32, %arg2: memref<16x32xf32, #tpu.memory_space<vmem>>, %arg3: memref<32x128xf32, #tpu.memory_space<vmem>>, %arg4: memref<32x128xf32, #tpu.memory_space<vmem>>, %arg5: memref<128x32xf32, #tpu.memory_space<vmem>>, %arg6: memref<16x32xf32, #tpu.memory_space<vmem>>, %arg7: memref<16x32xf32, #tpu.memory_space<vmem>>) attributes {dimension_semantics = [#tpu.dimension_semantics<parallel>, #tpu.dimension_semantics<arbitrary>], iteration_bounds = array<i64: 1, 1>, scalar_prefetch = 0 : i64, scratch_operands = 1 : i64, tpu.core_type = #tpu.core_type<tc>, window_params = [{transform_indices = @transform_0, window_bounds = array<i64: 16, 32>}, {transform_indices = @transform_1, window_bounds = array<i64: 32, 128>}, {transform_indices = @transform_2, window_bounds = array<i64: 32, 128>}, {transform_indices = @transform_3, window_bounds = array<i64: 128, 32>}, {transform_indices = @transform_4, window_bounds = array<i64: 16, 32>}]} {
    %c0_i32 = arith.constant 0 : i32
    %0 = arith.cmpi eq, %arg1, %c0_i32 : i32
    %1 = arith.extui %0 : i1 to i32
    %c0_i32_0 = arith.constant 0 : i32
    %2 = arith.cmpi ne, %1, %c0_i32_0 : i32
    scf.if %2 {
      %cst_17 = arith.constant 0.000000e+00 : f32
      %23 = vector.broadcast %cst_17 : f32 to vector<16x32xf32>
      %c0_18 = arith.constant 0 : index
      %c0_19 = arith.constant 0 : index
      %24 = vector.load %arg7[%c0_18, %c0_19] : memref<16x32xf32, #tpu.memory_space<vmem>>, vector<16x32xf32>
      tpu.vector_store %arg7[%c0_18, %c0_19], %23 {strides = array<i32>} : memref<16x32xf32, #tpu.memory_space<vmem>>, vector<16x32xf32>,
    } else {
    }
    %c0 = arith.constant 0 : index
    %c0_1 = arith.constant 0 : index
    %3 = vector.load %arg2[%c0, %c0_1] : memref<16x32xf32, #tpu.memory_space<vmem>>, vector<16x32xf32>
    %c0_2 = arith.constant 0 : index
    %c0_3 = arith.constant 0 : index
    %4 = vector.load %arg3[%c0_2, %c0_3] : memref<32x128xf32, #tpu.memory_space<vmem>>, vector<32x128xf32>
    %cst = arith.constant dense<0.000000e+00> : vector<16x128xf32>
    %5 = tpu.matmul %3, %4, %cst {dimension_numbers = #tpu.dot_dimension_numbers<[1], [0], [0], [1], [0, 0, 1, 1], [], []>} : vector<16x32xf32>, vector<32x128xf32>, vector<16x128xf32> -> vector<16x128xf32>
    %c0_4 = arith.constant 0 : index
    %c0_5 = arith.constant 0 : index
    %6 = vector.load %arg4[%c0_4, %c0_5] : memref<32x128xf32, #tpu.memory_space<vmem>>, vector<32x128xf32>
    %cst_6 = arith.constant dense<0.000000e+00> : vector<16x128xf32>
    %7 = tpu.matmul %3, %6, %cst_6 {dimension_numbers = #tpu.dot_dimension_numbers<[1], [0], [0], [1], [0, 0, 1, 1], [], []>} : vector<16x32xf32>, vector<32x128xf32>, vector<16x128xf32> -> vector<16x128xf32>
    %8 = arith.negf %5 : vector<16x128xf32>
    %9 = math.exp %8 : vector<16x128xf32>
    %cst_7 = arith.constant 1.000000e+00 : f32
    %10 = vector.broadcast %cst_7 : f32 to vector<16x128xf32>
    %11 = arith.addf %10, %9 : vector<16x128xf32>
    %12 = arith.divf %10, %11 : vector<16x128xf32>
    %13 = arith.mulf %5, %12 : vector<16x128xf32>
    %14 = arith.mulf %13, %7 : vector<16x128xf32>
    %c0_8 = arith.constant 0 : index
    %c0_9 = arith.constant 0 : index
    %15 = vector.load %arg7[%c0_8, %c0_9] : memref<16x32xf32, #tpu.memory_space<vmem>>, vector<16x32xf32>
    %c0_10 = arith.constant 0 : index
    %c0_11 = arith.constant 0 : index
    %16 = vector.load %arg5[%c0_10, %c0_11] : memref<128x32xf32, #tpu.memory_space<vmem>>, vector<128x32xf32>
    %cst_12 = arith.constant dense<0.000000e+00> : vector<16x32xf32>
    %17 = tpu.matmul %14, %16, %cst_12 {dimension_numbers = #tpu.dot_dimension_numbers<[1], [0], [0], [1], [0, 0, 1, 1], [], []>} : vector<16x128xf32>, vector<128x32xf32>, vector<16x32xf32> -> vector<16x32xf32>
    %18 = arith.addf %15, %17 : vector<16x32xf32>
    %c0_13 = arith.constant 0 : index
    %c0_14 = arith.constant 0 : index
    %19 = vector.load %arg7[%c0_13, %c0_14] : memref<16x32xf32, #tpu.memory_space<vmem>>, vector<16x32xf32>
    tpu.vector_store %arg7[%c0_13, %c0_14], %18 {strides = array<i32>} : memref<16x32xf32, #tpu.memory_space<vmem>>, vector<16x32xf32>,
    %c0_i32_15 = arith.constant 0 : i32
    %20 = arith.cmpi eq, %arg1, %c0_i32_15 : i32
    %21 = arith.extui %20 : i1 to i32
    %c0_i32_16 = arith.constant 0 : i32
    %22 = arith.cmpi ne, %21, %c0_i32_16 : i32
    scf.if %22 {
      %c0_17 = arith.constant 0 : index
      %c0_18 = arith.constant 0 : index
      %23 = vector.load %arg7[%c0_17, %c0_18] : memref<16x32xf32, #tpu.memory_space<vmem>>, vector<16x32xf32>
      %c0_19 = arith.constant 0 : index
      %c0_20 = arith.constant 0 : index
      %24 = vector.load %arg6[%c0_19, %c0_20] : memref<16x32xf32, #tpu.memory_space<vmem>>, vector<16x32xf32>
      tpu.vector_store %arg6[%c0_19, %c0_20], %23 {strides = array<i32>} : memref<16x32xf32, #tpu.memory_space<vmem>>, vector<16x32xf32>,
    } else {
    }
    return
  }
  func.func @transform_0(%arg0: i32, %arg1: i32) -> (i32, i32) {
    %c0_i32 = arith.constant 0 : i32
    %c0_i32_0 = arith.constant 0 : i32
    return %arg0, %c0_i32 : i32, i32
  }
  func.func @transform_1(%arg0: i32, %arg1: i32) -> (i32, i32) {
    %c0_i32 = arith.constant 0 : i32
    %c0_i32_0 = arith.constant 0 : i32
    return %c0_i32, %arg1 : i32, i32
  }
  func.func @transform_2(%arg0: i32, %arg1: i32) -> (i32, i32) {
    %c0_i32 = arith.constant 0 : i32
    %c0_i32_0 = arith.constant 0 : i32
    return %c0_i32, %arg1 : i32, i32
  }
  func.func @transform_3(%arg0: i32, %arg1: i32) -> (i32, i32) {
    %c0_i32 = arith.constant 0 : i32
    %c0_i32_0 = arith.constant 0 : i32
    return %arg1, %c0_i32 : i32, i32
  }
  func.func @transform_4(%arg0: i32, %arg1: i32) -> (i32, i32) {
    %c0_i32 = arith.constant 0 : i32
    %c0_i32_0 = arith.constant 0 : i32
    return %arg0, %c0_i32 : i32, i32
  }
}

</mosaic_0001>

<llo_original>
// kernel: tpu_custom_call.1
$region0: #{tpu_custom_call.1}
  #allocation0 [shape = 'u32[]', space=smem, size = 0x4, offset = 0x4, fixed_abs, tag = 'smem constant byte address 0x4 - core index']
  #allocation1 [shape = 'u32[144,128]{1,0:T(1,128)}', space=vmem, size = 0x12000, scoped, tag = 'internal scratch']
  #allocation2 [shape = 'f32[16,32]{1,0:T(8,128)}', space=vmem, size = 0x2000, scoped, tag = 'scratch operand']
  %s0 = inlined_call_operand.vmem [shape: f32[16,32], index: 0, kind: input, shape index: {}]
  %s1 = inlined_call_operand.vmem [shape: f32[32,128], index: 1, kind: input, shape index: {}]
  %s2 = inlined_call_operand.vmem [shape: f32[32,128], index: 2, kind: input, shape index: {}]
  %s3 = inlined_call_operand.vmem [shape: f32[128,32], index: 3, kind: input, shape index: {}]
  %s4 = inlined_call_operand.hbm [shape: f32[16,32], index: 4, kind: output, shape index: {}]
  %s5 = sld [smem:[#allocation0]]
  $region34: #{tpu_custom_call.1} parent=0
    _
  %s7 = ssub.s32 1, %s5
  %s8 = scalar_select 0, %s7, %s5
  $region1: #{tpu_custom_call.1} parent=0
    #allocation3 [shape = 'u8[8192]{0}', space=vmem, size = 0x2000, scoped, tag = 'output window, operand 0, single buffered']
    #allocation4 [shape = 's32[1]{0}', space=sflag, size = 0x4, scoped, tag = 'scoped memory for tpu_custom_call.1']
    %9 = vsyncpa [#allocation4], 0
    // Predicated region
    $region2: #{tpu_custom_call.1} parent=1 // pred_check
      _
    $region3: #{tpu_custom_call.1} parent=1 // pred_check_branch
      %11 = sbr.rel (0) target = $region5
    $region4: #{tpu_custom_call.1} parent=1 // pred_region
      _
    $region5: #{tpu_custom_call.1} parent=1 // pred_fallthru
      _
    // Predicated region
    $region6: #{tpu_custom_call.1} parent=1 // pred_check
      _
    $region7: #{tpu_custom_call.1} parent=1 // pred_check_branch
      %13 = sbr.rel (0) target = $region9
    $region8: #{tpu_custom_call.1} parent=1 // pred_region
      _
    $region9: #{tpu_custom_call.1} parent=1 // pred_fallthru
      _
    // Predicated region
    $region10: #{tpu_custom_call.1} parent=1 // pred_check
      _
    $region11: #{tpu_custom_call.1} parent=1 // pred_check_branch
      %15 = sbr.rel (0) target = $region13
    $region12: #{tpu_custom_call.1} parent=1 // pred_region
      _
    $region13: #{tpu_custom_call.1} parent=1 // pred_fallthru
      _
    // Predicated region
    $region14: #{tpu_custom_call.1} parent=1 // pred_check
      _
    $region15: #{tpu_custom_call.1} parent=1 // pred_check_branch
      %17 = sbr.rel (0) target = $region17
    $region16: #{tpu_custom_call.1} parent=1 // pred_region
      _
    $region17: #{tpu_custom_call.1} parent=1 // pred_fallthru
      _
    %p18 = scmp.eq.s32.totalorder 0, 0
    // Predicated region
    $region18: #{tpu_custom_call.1} parent=1 // pred_check
      %p19 = pneg %p18
    $region19: #{tpu_custom_call.1} parent=1 // pred_check_branch
      %21 = sbr.rel (%p19) target = $region21
    $region20: #{tpu_custom_call.1} parent=1 // pred_region
      %vm22 = vcmask 261120
      %23 = vst.msk [vmem:[#allocation2] sm:$0xff] %vm22, 0.0
      %24 = vst.msk [vmem:[#allocation2 + $0x8] sm:$0xff] %vm22, 0.0
    $region21: #{tpu_custom_call.1} parent=1 // pred_fallthru
      _
    %v25 = vld [vmem:[%s0] sm:$0xff]
    %v26 = vld [vmem:[%s0 + $0x8] sm:$0xff]
    %v27 = vld [vmem:[%s1] sm:$0xff]
    %v28 = vld [vmem:[%s1 + $0x8] sm:$0xff]
    %v29 = vld [vmem:[%s1 + $0x10] sm:$0xff]
    %v30 = vld [vmem:[%s1 + $0x18] sm:$0xff]
    %vm31 = vcmask 261120
    %v33 = vsel %vm31, %v25, 0
    %v36 = vsel %vm31, %v26, 0
    %38 = vmatprep.subr.mxu0 0.0
    %39 = vmatpush1.msra.mxu0 %v27
    %40 = vmatprep.subr.mxu0 0.0
    %41 = vmatpush1.msra.mxu0 %v28
    %42 = vmatprep.subr.mxu0 0.0
    %43 = vmatpush1.msra.mxu0 %v29
    %44 = vmatprep.subr.mxu0 0.0
    %45 = vmatpush1.msra.mxu0 %v30
    %46 = vmatprep.subr.mxu0 0.0
    %47 = vmatpush1.msra.mxu0 0.0
    %48 = vmatprep.subr.mxu0 0.0
    %49 = vmatpush1.msra.mxu0 0.0
    %50 = vmatprep.subr.mxu0 0.0
    %51 = vmatpush1.msra.mxu0 0.0
    %52 = vmatprep.subr.mxu0 0.0
    %53 = vmatpush1.msra.mxu0 0.0
    %54 = vmatprep.subr.mxu0 0.0
    %55 = vmatpush1.msra.mxu0 0.0
    %56 = vmatprep.subr.mxu0 0.0
    %57 = vmatpush1.msra.mxu0 0.0
    %58 = vmatprep.subr.mxu0 0.0
    %59 = vmatpush1.msra.mxu0 0.0
    %60 = vmatprep.subr.mxu0 0.0
    %61 = vmatpush1.msra.mxu0 0.0
    %62 = vmatprep.subr.mxu0 0.0
    %63 = vmatpush1.msra.mxu0 0.0
    %64 = vmatprep.subr.mxu0 0.0
    %65 = vmatpush1.msra.mxu0 0.0
    %66 = vmatprep.subr.mxu0 0.0
    %67 = vmatpush1.msra.mxu0 0.0
    %68 = vmatprep.subr.mxu0 0.0
    %69 = vmatpush1.msra.mxu0 0.0
    %70 = vmatprep.subr.mxu0 0.0
    %71 = vmatpush1.msra.mxu0 0.0
    %72 = vmatprep.subr.mxu0 0.0
    %73 = vmatpush1.msra.mxu0 0.0
    %74 = vmatprep.subr.mxu0 0.0
    %75 = vmatpush1.msra.mxu0 0.0
    %76 = vmatprep.subr.mxu0 0.0
    %77 = vmatpush1.msra.mxu0 0.0
    %78 = vmatprep.subr.mxu0 0.0
    %79 = vmatpush1.msra.mxu0 0.0
    %80 = vmatprep.subr.mxu0 0.0
    %81 = vmatpush1.msra.mxu0 0.0
    %82 = vmatprep.subr.mxu0 0.0
    %83 = vmatpush1.msra.mxu0 0.0
    %84 = vmatprep.subr.mxu0 0.0
    %85 = vmatpush1.msra.mxu0 0.0
    %86 = vmatprep.subr.mxu0 0.0
    %87 = vmatpush1.msra.mxu0 0.0
    %88 = vmatprep.subr.mxu0 0.0
    %89 = vmatpush1.msra.mxu0 0.0
    %90 = vmatprep.subr.mxu0 0.0
    %91 = vmatpush1.msra.mxu0 0.0
    %92 = vmatprep.subr.mxu0 0.0
    %93 = vmatpush1.msra.mxu0 0.0
    %94 = vmatprep.subr.mxu0 0.0
    %95 = vmatpush1.msra.mxu0 0.0
    %96 = vmatprep.subr.mxu0 0.0
    %97 = vmatpush1.msra.mxu0 0.0
    %98 = vmatprep.subr.mxu0 0.0
    %99 = vmatpush1.msra.mxu0 0.0
    %100 = vmatprep.subr.mxu0 0.0
    %101 = vmatpush1.msra.mxu0 0.0
    %102 = vmatprep.mubr.f32.mxu0 0.0
    %103 = vmatmul.mubr.f32.gmra.mrb[0].mxu0 %v33
    %v104 = vpop.f32.mrb[0].mxu0
    %v105 = vadd.f32 0.0, %v104
    %v106 = vpop.f32.mrb[0].mxu0
    %107 = vmatprep.mubr.f32.mxu0 0.0
    %108 = vmatmul.mubr.f32.gmra.mrb[0].mxu0 %v36
    %v109 = vpop.f32.mrb[0].mxu0
    %v110 = vadd.f32 0.0, %v109
    %v111 = vpop.f32.mrb[0].mxu0
    %112 = vdwg.mxu0
    %v113 = vld [vmem:[%s2] sm:$0xff]
    %v114 = vld [vmem:[%s2 + $0x8] sm:$0xff]
    %v115 = vld [vmem:[%s2 + $0x10] sm:$0xff]
    %v116 = vld [vmem:[%s2 + $0x18] sm:$0xff]
    %117 = vmatprep.subr.mxu0 0.0
    %118 = vmatpush1.msra.mxu0 %v113
    %119 = vmatprep.subr.mxu0 0.0
    %120 = vmatpush1.msra.mxu0 %v114
    %121 = vmatprep.subr.mxu0 0.0
    %122 = vmatpush1.msra.mxu0 %v115
    %123 = vmatprep.subr.mxu0 0.0
    %124 = vmatpush1.msra.mxu0 %v116
    %125 = vmatprep.subr.mxu0 0.0
    %126 = vmatpush1.msra.mxu0 0.0
    %127 = vmatprep.subr.mxu0 0.0
    %128 = vmatpush1.msra.mxu0 0.0
    %129 = vmatprep.subr.mxu0 0.0
    %130 = vmatpush1.msra.mxu0 0.0
    %131 = vmatprep.subr.mxu0 0.0
    %132 = vmatpush1.msra.mxu0 0.0
    %133 = vmatprep.subr.mxu0 0.0
    %134 = vmatpush1.msra.mxu0 0.0
    %135 = vmatprep.subr.mxu0 0.0
    %136 = vmatpush1.msra.mxu0 0.0
    %137 = vmatprep.subr.mxu0 0.0
    %138 = vmatpush1.msra.mxu0 0.0
    %139 = vmatprep.subr.mxu0 0.0
    %140 = vmatpush1.msra.mxu0 0.0
    %141 = vmatprep.subr.mxu0 0.0
    %142 = vmatpush1.msra.mxu0 0.0
    %143 = vmatprep.subr.mxu0 0.0
    %144 = vmatpush1.msra.mxu0 0.0
    %145 = vmatprep.subr.mxu0 0.0
    %146 = vmatpush1.msra.mxu0 0.0
    %147 = vmatprep.subr.mxu0 0.0
    %148 = vmatpush1.msra.mxu0 0.0
    %149 = vmatprep.subr.mxu0 0.0
    %150 = vmatpush1.msra.mxu0 0.0
    %151 = vmatprep.subr.mxu0 0.0
    %152 = vmatpush1.msra.mxu0 0.0
    %153 = vmatprep.subr.mxu0 0.0
    %154 = vmatpush1.msra.mxu0 0.0
    %155 = vmatprep.subr.mxu0 0.0
    %156 = vmatpush1.msra.mxu0 0.0
    %157 = vmatprep.subr.mxu0 0.0
    %158 = vmatpush1.msra.mxu0 0.0
    %159 = vmatprep.subr.mxu0 0.0
    %160 = vmatpush1.msra.mxu0 0.0
    %161 = vmatprep.subr.mxu0 0.0
    %162 = vmatpush1.msra.mxu0 0.0
    %163 = vmatprep.subr.mxu0 0.0
    %164 = vmatpush1.msra.mxu0 0.0
    %165 = vmatprep.subr.mxu0 0.0
    %166 = vmatpush1.msra.mxu0 0.0
    %167 = vmatprep.subr.mxu0 0.0
    %168 = vmatpush1.msra.mxu0 0.0
    %169 = vmatprep.subr.mxu0 0.0
    %170 = vmatpush1.msra.mxu0 0.0
    %171 = vmatprep.subr.mxu0 0.0
    %172 = vmatpush1.msra.mxu0 0.0
    %173 = vmatprep.subr.mxu0 0.0
    %174 = vmatpush1.msra.mxu0 0.0
    %175 = vmatprep.subr.mxu0 0.0
    %176 = vmatpush1.msra.mxu0 0.0
    %177 = vmatprep.subr.mxu0 0.0
    %178 = vmatpush1.msra.mxu0 0.0
    %179 = vmatprep.subr.mxu0 0.0
    %180 = vmatpush1.msra.mxu0 0.0
    %181 = vmatprep.mubr.f32.mxu0 0.0
    %182 = vmatmul.mubr.f32.gmra.mrb[0].mxu0 %v33
    %v183 = vpop.f32.mrb[0].mxu0
    %v184 = vadd.f32 0.0, %v183
    %v185 = vpop.f32.mrb[0].mxu0
    %186 = vmatprep.mubr.f32.mxu0 0.0
    %187 = vmatmul.mubr.f32.gmra.mrb[0].mxu0 %v36
    %v188 = vpop.f32.mrb[0].mxu0
    %v189 = vadd.f32 0.0, %v188
    %v190 = vpop.f32.mrb[0].mxu0
    %191 = vdwg.mxu0
    %v192 = vxor.u32 %v105, 2147483648
    %v193 = vxor.u32 %v110, 2147483648
    %v194 = vmul.f32 %v192, 1.442695
    %v195 = vpow.pop %v194
    %v196 = vmul.f32 %v193, 1.442695
    %v197 = vpow.pop %v196
    %v198 = vadd.f32 %v195, 1.0
    %v199 = vadd.f32 %v197, 1.0
    %v200 = vrcp.pop %v198
    %v201 = vmul.f32 1.0, %v200
    %v202 = vrcp.pop %v199
    %v203 = vmul.f32 1.0, %v202
    %v204 = vmul.f32 %v105, %v201
    %v205 = vmul.f32 %v110, %v203
    %v206 = vmul.f32 %v204, %v184
    %v207 = vmul.f32 %v205, %v189
    %v208 = vld [vmem:[#allocation2] sm:$0xff]
    %v209 = vld [vmem:[#allocation2 + $0x8] sm:$0xff]
    %v210 = vld [vmem:[%s3] sm:$0xff]
    %v211 = vld [vmem:[%s3 + $0x8] sm:$0xff]
    %v212 = vld [vmem:[%s3 + $0x10] sm:$0xff]
    %v213 = vld [vmem:[%s3 + $0x18] sm:$0xff]
    %v214 = vld [vmem:[%s3 + $0x20] sm:$0xff]
    %v215 = vld [vmem:[%s3 + $0x28] sm:$0xff]
    %v216 = vld [vmem:[%s3 + $0x30] sm:$0xff]
    %v217 = vld [vmem:[%s3 + $0x38] sm:$0xff]
    %v218 = vld [vmem:[%s3 + $0x40] sm:$0xff]
    %v219 = vld [vmem:[%s3 + $0x48] sm:$0xff]
    %v220 = vld [vmem:[%s3 + $0x50] sm:$0xff]
    %v221 = vld [vmem:[%s3 + $0x58] sm:$0xff]
    %v222 = vld [vmem:[%s3 + $0x60] sm:$0xff]
    %v223 = vld [vmem:[%s3 + $0x68] sm:$0xff]
    %v224 = vld [vmem:[%s3 + $0x70] sm:$0xff]
    %v225 = vld [vmem:[%s3 + $0x78] sm:$0xff]
    %226 = vmatprep.subr.mxu0 0.0
    %227 = vmatpush1.msra.mxu0 %v210
    %228 = vmatprep.subr.mxu0 0.0
    %229 = vmatpush1.msra.mxu0 %v211
    %230 = vmatprep.subr.mxu0 0.0
    %231 = vmatpush1.msra.mxu0 %v212
    %232 = vmatprep.subr.mxu0 0.0
    %233 = vmatpush1.msra.mxu0 %v213
    %234 = vmatprep.subr.mxu0 0.0
    %235 = vmatpush1.msra.mxu0 %v214
    %236 = vmatprep.subr.mxu0 0.0
    %237 = vmatpush1.msra.mxu0 %v215
    %238 = vmatprep.subr.mxu0 0.0
    %239 = vmatpush1.msra.mxu0 %v216
    %240 = vmatprep.subr.mxu0 0.0
    %241 = vmatpush1.msra.mxu0 %v217
    %242 = vmatprep.subr.mxu0 0.0
    %243 = vmatpush1.msra.mxu0 %v218
    %244 = vmatprep.subr.mxu0 0.0
    %245 = vmatpush1.msra.mxu0 %v219
    %246 = vmatprep.subr.mxu0 0.0
    %247 = vmatpush1.msra.mxu0 %v220
    %248 = vmatprep.subr.mxu0 0.0
    %249 = vmatpush1.msra.mxu0 %v221
    %250 = vmatprep.subr.mxu0 0.0
    %251 = vmatpush1.msra.mxu0 %v222
    %252 = vmatprep.subr.mxu0 0.0
    %253 = vmatpush1.msra.mxu0 %v223
    %254 = vmatprep.subr.mxu0 0.0
    %255 = vmatpush1.msra.mxu0 %v224
    %256 = vmatprep.subr.mxu0 0.0
    %257 = vmatpush1.msra.mxu0 %v225
    %258 = vmatprep.subr.mxu0 0.0
    %259 = vmatpush1.msra.mxu0 0.0
    %260 = vmatprep.subr.mxu0 0.0
    %261 = vmatpush1.msra.mxu0 0.0
    %262 = vmatprep.subr.mxu0 0.0
    %263 = vmatpush1.msra.mxu0 0.0
    %264 = vmatprep.subr.mxu0 0.0
    %265 = vmatpush1.msra.mxu0 0.0
    %266 = vmatprep.subr.mxu0 0.0
    %267 = vmatpush1.msra.mxu0 0.0
    %268 = vmatprep.subr.mxu0 0.0
    %269 = vmatpush1.msra.mxu0 0.0
    %270 = vmatprep.subr.mxu0 0.0
    %271 = vmatpush1.msra.mxu0 0.0
    %272 = vmatprep.subr.mxu0 0.0
    %273 = vmatpush1.msra.mxu0 0.0
    %274 = vmatprep.subr.mxu0 0.0
    %275 = vmatpush1.msra.mxu0 0.0
    %276 = vmatprep.subr.mxu0 0.0
    %277 = vmatpush1.msra.mxu0 0.0
    %278 = vmatprep.subr.mxu0 0.0
    %279 = vmatpush1.msra.mxu0 0.0
    %280 = vmatprep.subr.mxu0 0.0
    %281 = vmatpush1.msra.mxu0 0.0
    %282 = vmatprep.subr.mxu0 0.0
    %283 = vmatpush1.msra.mxu0 0.0
    %284 = vmatprep.subr.mxu0 0.0
    %285 = vmatpush1.msra.mxu0 0.0
    %286 = vmatprep.subr.mxu0 0.0
    %287 = vmatpush1.msra.mxu0 0.0
    %288 = vmatprep.subr.mxu0 0.0
    %289 = vmatpush1.msra.mxu0 0.0
    %290 = vmatprep.mubr.f32.mxu0 0.0
    %291 = vmatmul.mubr.f32.gmra.mrb[0].mxu0 %v206
    %v292 = vpop.f32.mrb[0].mxu0
    %v293 = vadd.f32 0.0, %v292
    %v294 = vpop.f32.mrb[0].mxu0
    %295 = vmatprep.mubr.f32.mxu0 0.0
    %296 = vmatmul.mubr.f32.gmra.mrb[0].mxu0 %v207
    %v297 = vpop.f32.mrb[0].mxu0
    %v298 = vadd.f32 0.0, %v297
    %v299 = vpop.f32.mrb[0].mxu0
    %300 = vdwg.mxu0
    %v301 = vadd.f32 %v208, %v293
    %v302 = vadd.f32 %v209, %v298
    %303 = vst.msk [vmem:[#allocation2] sm:$0xff] %vm31, %v301
    %304 = vst.msk [vmem:[#allocation2 + $0x8] sm:$0xff] %vm31, %v302
    // Predicated region
    $region22: #{tpu_custom_call.1} parent=1 // pred_check
      %p305 = pneg %p18
    $region23: #{tpu_custom_call.1} parent=1 // pred_check_branch
      %307 = sbr.rel (%p305) target = $region25
    $region24: #{tpu_custom_call.1} parent=1 // pred_region
      %v308 = vld [vmem:[#allocation2] sm:$0xff]
      %v309 = vld [vmem:[#allocation2 + $0x8] sm:$0xff]
      %310 = vst.msk [vmem:[#allocation3] sm:$0xff] %vm31, %v308
      %311 = vst.msk [vmem:[#allocation3 + $0x8] sm:$0xff] %vm31, %v309
    $region25: #{tpu_custom_call.1} parent=1 // pred_fallthru
      _
    // Predicated region
    $region26: #{tpu_custom_call.1} parent=1 // pred_check
      _
    $region27: #{tpu_custom_call.1} parent=1 // pred_check_branch
      %313 = sbr.rel (0) target = $region29
    $region28: #{tpu_custom_call.1} parent=1 // pred_region
      %s315 = ssub.s32 256, 256
      %316 = vsyncadd [#allocation4], %s315
      %s317 = sshll.u32 [#allocation3], 4
      %s318 = int_to_ptr.vmem [resolvable:$true] %s317
      %323 = dma.vmem_to_hbm [thread:$0]  %s318, 256, %s4, [#allocation4], 128, 128, 8
    $region29: #{tpu_custom_call.1} parent=1 // pred_fallthru
      _
    // Predicated region
    $region30: #{tpu_custom_call.1} parent=1 // pred_check
      _
    $region31: #{tpu_custom_call.1} parent=1 // pred_check_branch
      %325 = sbr.rel (0) target = $region33
    $region32: #{tpu_custom_call.1} parent=1 // pred_region
      %326 = dma.done [#allocation4], 256
    $region33: #{tpu_custom_call.1} parent=1 // pred_fallthru
      _
    %327 = vsyncpa [#allocation4], 1

</llo_original>
